<compile_context>
chip_gen: v5e
topology: v5e:2x2
jax: 0.10.0
libtpu: 0.0.40
codegen_flags: <defaults>
</compile_context>

<pallas_src>
import math

import jax
import jax.numpy as jnp
from jax.experimental import pallas as pl
from jax.experimental.pallas import tpu as pltpu


# ---------------------------------------------------------------------------
# helpers
# ---------------------------------------------------------------------------
def _round_up(x, m):
    return (x + m - 1) // m * m


def _sublane(dtype):
    """Minimum sublane multiple for a dtype (8 f32 / 16 bf16 / 32 int8)."""
    return {4: 8, 2: 16, 1: 32}.get(jnp.dtype(dtype).itemsize, 8)


# ---------------------------------------------------------------------------
# Kernel 1: Linear forward  y = x @ W^T + b
# The kernel consumes a cached pre-transposed bf16 weight of shape (Kp, Np),
# so the contraction is a plain (tk, tn) RHS (no in-kernel transpose).
# ---------------------------------------------------------------------------
def _linear_kernel(x_ref, wt_ref, b_ref, o_ref, acc_ref):
    k = pl.program_id(2)

    @pl.when(k == 0)
    def _():
        acc_ref[...] = jnp.zeros_like(acc_ref)

    # bf16 x bf16 -> f32 accumulate on the MXU; x is cast on the VPU in-kernel.
    acc_ref[...] += jnp.dot(x_ref[...].astype(jnp.bfloat16), wt_ref[...],
                            preferred_element_type=jnp.float32)

    @pl.when(k == pl.num_programs(2) - 1)
    def _():
        o_ref[...] = (acc_ref[...] + b_ref[...]).astype(o_ref.dtype)


def _forward_geometry(Fin, Fout):
    """MXU-aligned (Kp, Np, tk, tn), chosen once per weight shape."""
    Kp = _round_up(Fin, 128)
    Np = _round_up(Fout, 128)
    # Collapse the K grid axis whenever the full K extent fits comfortably in
    # VMEM (per-step overhead ~0.35us dominates at small M); otherwise the
    # largest <=512 multiple of 128 dividing Kp.
    if Kp <= 2048:
        tk = Kp
    else:
        tk = 512
        while Kp % tk:
            tk -= 128
    # tn: largest of (512, 256, 128) dividing Np while leaving >=2 blocks on
    # the 'parallel' j axis so v7x's second TensorCore gets work.
    tn = Np
    for cand in (512, 256, 128):
        if Np % cand == 0 and Np // cand >= 2:
            tn = cand
            break
    return Kp, Np, tk, tn


def _build_linear_forward(Fin, Fout):
    Kp, Np, tk, tn = _forward_geometry(Fin, Fout)

    @jax.jit
    def fwd(x, wt_bf16, bias_pad):
        B = x.shape[0]
        tm = _round_up(B, _sublane(x.dtype)) if B <= 256 else 256
        Mp = _round_up(B, tm)
        if (Mp, Kp) != (B, Fin):            # only pads x (activations), never W
            x = jnp.pad(x, ((0, Mp - B), (0, Kp - Fin)))
        out = pl.pallas_call(
            _linear_kernel,
            out_shape=jax.ShapeDtypeStruct((Mp, Np), x.dtype),
            grid_spec=pltpu.PrefetchScalarGridSpec(
                num_scalar_prefetch=0,
                grid=(Mp // tm, Np // tn, Kp // tk),
                in_specs=[
                    pl.BlockSpec((tm, tk), lambda i, j, k: (i, k)),   # x
                    pl.BlockSpec((tk, tn), lambda i, j, k: (k, j)),   # W^T (cached)
                    pl.BlockSpec((1, tn), lambda i, j, k: (0, j)),    # bias
                ],
                out_specs=pl.BlockSpec((tm, tn), lambda i, j, k: (i, j)),
                scratch_shapes=[pltpu.VMEM((tm, tn), jnp.float32)],
            ),
            compiler_params=pltpu.CompilerParams(
                dimension_semantics=("parallel", "parallel", "arbitrary")),
        )(x, wt_bf16, bias_pad)
        if (Mp, Np) != (B, Fout):           # only sliced when padding happened
            out = out[:B, :Fout]
        return out

    return fwd, Kp, Np


# ---------------------------------------------------------------------------
# Kernel 2: fused SWA parameter averaging over the persistent lane-dense slab.
# n == 0 is handled on the host (pure copy, no launch); here n >= 1 always.
# ---------------------------------------------------------------------------
def _make_swa_kernel(avg_fn):
    def kernel(n_ref, swa_ref, mdl_ref, out_ref):
        n = n_ref[0]                           # int32 scalar in SMEM
        swa = swa_ref[...]
        mdl = mdl_ref[...]
        if avg_fn is None:
            # Hoisted divide: one scalar reciprocal, broadcast multiply.
            scale = 1.0 / (n.astype(jnp.float32) + 1.0)
            out_ref[...] = (swa + (mdl - swa) * scale).astype(out_ref.dtype)
        else:
            # TODO(synk): avg_fn must be a JAX-traceable elementwise function;
            # arbitrary Python/torch callables cannot be lowered into the kernel.
            out_ref[...] = avg_fn(swa, mdl, n).astype(out_ref.dtype)
    return kernel


def _slab_geometry(total):
    C = 1024 if total >= (1 << 20) else (512 if total >= 512 else 128)
    R = -(-total // C)
    tr = min(512, _round_up(R, 8))
    if R > 8 and _round_up(R, tr) // tr < 2:
        tr = _round_up(-(-R // 2), 8)          # keep >=2 blocks (v7x megacore)
    Rp = _round_up(R, tr)
    return C, R, tr, Rp


def _build_swa_call(Rp, C, tr, dtype, avg_fn):
    spec = pl.BlockSpec((tr, C), lambda i, n: (i, 0))
    call = pl.pallas_call(
        _make_swa_kernel(avg_fn),
        out_shape=jax.ShapeDtypeStruct((Rp, C), dtype),
        grid_spec=pltpu.PrefetchScalarGridSpec(
            num_scalar_prefetch=1,
            grid=(Rp // tr,),
            in_specs=[spec, spec],
            out_specs=spec,
        ),
        # NOTE: with num_scalar_prefetch=1 the scalar `n` is pallas input 0,
        # so the persistent SWA slab is input index 1; it aliases output 0.
        input_output_aliases={1: 0},
        compiler_params=pltpu.CompilerParams(
            dimension_semantics=("parallel",)),
    )
    # Donate the SWA slab at the jit boundary so the alias is a true in-place
    # update (read-swa / read-model / write-swa, no defensive copy).
    return jax.jit(call, donate_argnums=(1,))


# ---------------------------------------------------------------------------
# AveragedModel: Python-side glue mirroring the PyTorch module
# ---------------------------------------------------------------------------
class AveragedModel:
    """JAX/Pallas port of torch.optim.swa_utils.AveragedModel wrapping a
    Linear layer. Parameters: {'weight': (Fout, Fin), 'bias': (Fout,)}.
    The averaged parameters live in a single lane-dense f32 slab; a cached,
    padded, pre-transposed bf16 weight is used for the forward pass.
    """

    def __init__(self, model_params, avg_fn=None):
        self.avg_fn = avg_fn
        self.n_averaged = 0                    # PyTorch's long buffer (host int)

        self._names = list(model_params.keys())
        self._shapes = [tuple(jnp.shape(model_params[k])) for k in self._names]
        self._sizes = [int(math.prod(s)) for s in self._shapes]
        self._offsets = []
        off = 0
        for s in self._sizes:
            self._offsets.append(off)
            off += s
        self._total = off

        self._C, self._R, self._tr, self._Rp = _slab_geometry(self._total)
        self._padded_total = self._Rp * self._C

        # persistent packed slab (deepcopy of the wrapped model's params, f32)
        self._swa_slab = self._pack(
            [jnp.asarray(model_params[k]) for k in self._names])

        self._swa_call = _build_swa_call(self._Rp, self._C, self._tr,
                                         jnp.float32, avg_fn)

        self._Fout, self._Fin = self._shapes[self._names.index("weight")]
        self._fwd, self._Kp, self._Np = _build_linear_forward(self._Fin,
                                                              self._Fout)
        self._refresh_forward_cache()

    # ---- slab pack / unpack -------------------------------------------------
    def _pack(self, plist):
        flat = jnp.concatenate([jnp.ravel(p).astype(jnp.float32)
                                for p in plist])
        pad = self._padded_total - self._total
        if pad:
            flat = jnp.concatenate([flat, jnp.zeros((pad,), jnp.float32)])
        return flat.reshape(self._Rp, self._C)

    def _unpack(self, slab):
        flat = slab.reshape(-1)
        return {name: flat[o:o + sz].reshape(shape)
                for name, o, sz, shape in zip(self._names, self._offsets,
                                              self._sizes, self._shapes)}

    @property
    def params(self):
        """f32 views of the averaged parameters (for inspection / tests)."""
        return self._unpack(self._swa_slab)

    # ---- forward-cache: padded transposed bf16 weight + padded f32 bias -----
    def _refresh_forward_cache(self):
        p = self._unpack(self._swa_slab)
        w, b = p["weight"], p["bias"]
        wt = w.T                                        # (Fin, Fout), per update
        if (self._Kp, self._Np) != (self._Fin, self._Fout):
            wt = jnp.pad(wt, ((0, self._Kp - self._Fin),
                              (0, self._Np - self._Fout)))
            b = jnp.pad(b, (0, self._Np - self._Fout))
        # bf16 shadow weight: half the weight streaming, bf16 MXU rate; the
        # running average itself stays f32 in the slab.
        self._wt_bf16 = wt.astype(jnp.bfloat16)
        self._bias_pad = b.reshape(1, self._Np).astype(jnp.float32)

    # ---- module API ----------------------------------------------------------
    def forward(self, x):
        return self._fwd(x, self._wt_bf16, self._bias_pad)

    __call__ = forward

    def update_parameters(self, model_params):
        mdl_list = [jnp.asarray(model_params[k]) for k in self._names]
        if self.n_averaged == 0:
            # PyTorch copy_ branch handled on the host: no kernel launch.
            self._swa_slab = self._pack(mdl_list)
        else:
            n_arr = jnp.asarray([self.n_averaged], dtype=jnp.int32)
            self._swa_slab = self._swa_call(n_arr, self._swa_slab,
                                            self._pack(mdl_list))
        self.n_averaged += 1
        self._refresh_forward_cache()


# ---------------------------------------------------------------------------
if __name__ == "__main__":
    key = jax.random.PRNGKey(0)
    k_w, k_b, k_x, k_w2, k_b2 = jax.random.split(key, 5)

    # Small but tiling-exercising shapes: Fin=512 collapses K to one step,
    # Fout=384 -> tn=128 gives 3 parallel j blocks with zero padding.
    batch, in_features, out_features = 16, 512, 384

    model_params = {
        "weight": jax.random.normal(k_w, (out_features, in_features),
                                    jnp.float32) * 0.1,
        "bias": jax.random.normal(k_b, (out_features,), jnp.float32) * 0.1,
    }
    swa_model = AveragedModel(model_params)

    x = jax.random.normal(k_x, (batch, in_features), jnp.float32)

    # forward pass through the averaged model (tiled Pallas matmul kernel)
    y = jax.block_until_ready(swa_model(x))
    y_ref = x @ model_params["weight"].T + model_params["bias"]
    assert jnp.allclose(y, y_ref, atol=3e-2, rtol=3e-2), "forward mismatch"

    # simulate two SWA updates with "newer" model parameters
    updated_params = {
        "weight": jax.random.normal(k_w2, (out_features, in_features),
                                    jnp.float32) * 0.1,
        "bias": jax.random.normal(k_b2, (out_features,), jnp.float32) * 0.1,
    }
    swa_model.update_parameters(model_params)     # n_averaged == 0 -> host copy
    swa_model.update_parameters(updated_params)   # n_averaged == 1 -> average

    w_expect = 0.5 * (model_params["weight"] + updated_params["weight"])
    b_expect = 0.5 * (model_params["bias"] + updated_params["bias"])
    assert jnp.allclose(swa_model.params["weight"], w_expect,
                        atol=1e-6, rtol=1e-6), "SWA weight mismatch"
    assert jnp.allclose(swa_model.params["bias"], b_expect,
                        atol=1e-6, rtol=1e-6), "SWA bias mismatch"

    # forward with the averaged parameters
    y2 = jax.block_until_ready(swa_model(x))
    y2_ref = x @ w_expect.T + b_expect
    assert jnp.allclose(y2, y2_ref, atol=3e-2, rtol=3e-2), "forward-2 mismatch"

    # custom avg_fn (EMA) traced into the kernel
    ema_fn = lambda avg, p, n: 0.9 * avg + 0.1 * p
    ema_model = AveragedModel(model_params, avg_fn=ema_fn)
    ema_model.update_parameters(model_params)      # copy branch (host)
    ema_model.update_parameters(updated_params)    # EMA branch (kernel)
    w_ema = 0.9 * model_params["weight"] + 0.1 * updated_params["weight"]
    b_ema = 0.9 * model_params["bias"] + 0.1 * updated_params["bias"]
    assert jnp.allclose(ema_model.params["weight"], w_ema,
                        atol=1e-6, rtol=1e-6), "EMA weight mismatch"
    assert jnp.allclose(ema_model.params["bias"], b_ema,
                        atol=1e-6, rtol=1e-6), "EMA bias mismatch"

    print("KERNEL_OK")
</pallas_src>

<mosaic_0001>
module attributes {stable_mosaic.version = 11 : i64} {
  func.func @_linear_kernel(%arg0: i32, %arg1: i32, %arg2: i32, %arg3: memref<16x512xf32, #tpu.memory_space<vmem>>, %arg4: memref<512x128xbf16, #tpu.memory_space<vmem>>, %arg5: memref<1x128xf32, #tpu.memory_space<vmem>>, %arg6: memref<16x128xf32, #tpu.memory_space<vmem>>, %arg7: memref<16x128xf32, #tpu.memory_space<vmem>>) attributes {dimension_semantics = [#tpu.dimension_semantics<parallel>, #tpu.dimension_semantics<parallel>, #tpu.dimension_semantics<arbitrary>], iteration_bounds = array<i64: 1, 3, 1>, scalar_prefetch = 0 : i64, scratch_operands = 1 : i64, tpu.core_type = #tpu.core_type<tc>, window_params = [{transform_indices = @transform_0, window_bounds = array<i64: 16, 512>}, {transform_indices = @transform_1, window_bounds = array<i64: 512, 128>}, {transform_indices = @transform_2, window_bounds = array<i64: 1, 128>}, {transform_indices = @transform_3, window_bounds = array<i64: 16, 128>}]} {
    %c0_i32 = arith.constant 0 : i32
    %0 = arith.cmpi eq, %arg2, %c0_i32 : i32
    %1 = arith.extui %0 : i1 to i32
    %c0_i32_0 = arith.constant 0 : i32
    %2 = arith.cmpi ne, %1, %c0_i32_0 : i32
    scf.if %2 {
      %cst_10 = arith.constant 0.000000e+00 : f32
      %13 = vector.broadcast %cst_10 : f32 to vector<16x128xf32>
      %c0_11 = arith.constant 0 : index
      %c0_12 = arith.constant 0 : index
      %14 = vector.load %arg7[%c0_11, %c0_12] : memref<16x128xf32, #tpu.memory_space<vmem>>, vector<16x128xf32>
      tpu.vector_store %arg7[%c0_11, %c0_12], %13 {strides = array<i32>} : memref<16x128xf32, #tpu.memory_space<vmem>>, vector<16x128xf32>,
    } else {
    }
    %c0 = arith.constant 0 : index
    %c0_1 = arith.constant 0 : index
    %3 = vector.load %arg7[%c0, %c0_1] : memref<16x128xf32, #tpu.memory_space<vmem>>, vector<16x128xf32>
    %c0_2 = arith.constant 0 : index
    %c0_3 = arith.constant 0 : index
    %4 = vector.load %arg3[%c0_2, %c0_3] : memref<16x512xf32, #tpu.memory_space<vmem>>, vector<16x512xf32>
    %5 = arith.truncf %4 : vector<16x512xf32> to vector<16x512xbf16>
    %c0_4 = arith.constant 0 : index
    %c0_5 = arith.constant 0 : index
    %6 = vector.load %arg4[%c0_4, %c0_5] : memref<512x128xbf16, #tpu.memory_space<vmem>>, vector<512x128xbf16>
    %cst = arith.constant dense<0.000000e+00> : vector<16x128xf32>
    %7 = tpu.matmul %5, %6, %cst {dimension_numbers = #tpu.dot_dimension_numbers<[1], [0], [0], [1], [0, 0, 1, 1], [], []>} : vector<16x512xbf16>, vector<512x128xbf16>, vector<16x128xf32> -> vector<16x128xf32>
    %8 = arith.addf %3, %7 : vector<16x128xf32>
    %c0_6 = arith.constant 0 : index
    %c0_7 = arith.constant 0 : index
    %9 = vector.load %arg7[%c0_6, %c0_7] : memref<16x128xf32, #tpu.memory_space<vmem>>, vector<16x128xf32>
    tpu.vector_store %arg7[%c0_6, %c0_7], %8 {strides = array<i32>} : memref<16x128xf32, #tpu.memory_space<vmem>>, vector<16x128xf32>,
    %c0_i32_8 = arith.constant 0 : i32
    %10 = arith.cmpi eq, %arg2, %c0_i32_8 : i32
    %11 = arith.extui %10 : i1 to i32
    %c0_i32_9 = arith.constant 0 : i32
    %12 = arith.cmpi ne, %11, %c0_i32_9 : i32
    scf.if %12 {
      %c0_10 = arith.constant 0 : index
      %c0_11 = arith.constant 0 : index
      %13 = vector.load %arg7[%c0_10, %c0_11] : memref<16x128xf32, #tpu.memory_space<vmem>>, vector<16x128xf32>
      %c0_12 = arith.constant 0 : index
      %c0_13 = arith.constant 0 : index
      %14 = vector.load %arg5[%c0_12, %c0_13] : memref<1x128xf32, #tpu.memory_space<vmem>>, vector<1x128xf32>
      %15 = vector.broadcast %14 : vector<1x128xf32> to vector<16x128xf32>
      %16 = arith.addf %13, %15 : vector<16x128xf32>
      %c0_14 = arith.constant 0 : index
      %c0_15 = arith.constant 0 : index
      %17 = vector.load %arg6[%c0_14, %c0_15] : memref<16x128xf32, #tpu.memory_space<vmem>>, vector<16x128xf32>
      tpu.vector_store %arg6[%c0_14, %c0_15], %16 {strides = array<i32>} : memref<16x128xf32, #tpu.memory_space<vmem>>, vector<16x128xf32>,
    } else {
    }
    return
  }
  func.func @transform_0(%arg0: i32, %arg1: i32, %arg2: i32) -> (i32, i32) {
    %c0_i32 = arith.constant 0 : i32
    return %arg0, %arg2 : i32, i32
  }
  func.func @transform_1(%arg0: i32, %arg1: i32, %arg2: i32) -> (i32, i32) {
    %c0_i32 = arith.constant 0 : i32
    return %arg2, %arg1 : i32, i32
  }
  func.func @transform_2(%arg0: i32, %arg1: i32, %arg2: i32) -> (i32, i32) {
    %c0_i32 = arith.constant 0 : i32
    %c0_i32_0 = arith.constant 0 : i32
    return %c0_i32, %arg1 : i32, i32
  }
  func.func @transform_3(%arg0: i32, %arg1: i32, %arg2: i32) -> (i32, i32) {
    %c0_i32 = arith.constant 0 : i32
    return %arg0, %arg1 : i32, i32
  }
}

</mosaic_0001>

<llo_original>
// kernel: fwd.1
$region0: #{fwd.1}
  #allocation0 [shape = 'u32[]', space=smem, size = 0x4, offset = 0x4, fixed_abs, tag = 'smem constant byte address 0x4 - core index']
  #allocation1 [shape = 'u32[72,128]{1,0:T(1,128)}', space=vmem, size = 0x9000, scoped, tag = 'internal scratch']
  #allocation2 [shape = 'f32[16,128]{1,0:T(8,128)}', space=vmem, size = 0x2000, scoped, tag = 'scratch operand']
  %s0 = inlined_call_operand.hbm [shape: f32[16,512], index: 0, kind: input, shape index: {}]
  %s1 = inlined_call_operand.hbm [shape: bf16[512,384], index: 1, kind: input, shape index: {}]
  %s2 = inlined_call_operand.hbm [shape: f32[1,384], index: 2, kind: input, shape index: {}]
  %s3 = inlined_call_operand.hbm [shape: f32[16,384], index: 3, kind: output, shape index: {}]
  %s4 = sld [smem:[#allocation0]]
  $region65: #{fwd.1} parent=0
    _
  %s6 = ssub.s32 1, %s4
  %s7 = scalar_select 0, %s6, %s4
  $region1: #{fwd.1} parent=0
    #allocation3 [shape = 'u8[32768]{0}', space=vmem, size = 0x8000, scoped, tag = 'input window, operand 0, single buffered']
    #allocation4 [shape = 's32[2]{0}', space=sflag, size = 0x8, scoped, tag = 'scoped memory for fwd.1']
    #allocation5 [shape = 's32[2]{0}', space=sflag, size = 0x8, scoped, tag = 'scoped memory for fwd.1']
    #allocation6 [shape = 'u8[262144]{0}', space=vmem, size = 0x40000, scoped, tag = 'input window, operand 1']
    #allocation7 [shape = 's32[2]{0}', space=sflag, size = 0x8, scoped, tag = 'scoped memory for fwd.1']
    #allocation8 [shape = 'u8[1024]{0}', space=vmem, size = 0x400, scoped, tag = 'input window, operand 2']
    #allocation9 [shape = 'u8[16384]{0}', space=vmem, size = 0x4000, scoped, tag = 'output window, operand 0']
    %8 = vsyncpa [#allocation4], 0
    %9 = vsyncpa [#allocation7], 0
    %s10 = scalar_lea.sflag [#allocation7], 1
    %11 = vsyncpa %s10, 0
    %12 = vsyncpa [#allocation5], 0
    %s13 = scalar_lea.sflag [#allocation5], 1
    %14 = vsyncpa %s13, 0
    loop: start=0, step=1, limit=5
    $region2: #{fwd.1} parent=1 // loop_pre_header
      _
    $region3: #{fwd.1} parent=1 // loop_header
      %s16 = sphi 0, %s20
      %p17 = scmp.ge.s32.totalorder %s16, 5
      %s23 = sphi 0, %s42
      %s24 = sphi 0, %s38
      %s25 = sphi 0, %s34
      %s26 = sphi 0, %s23
      %s27 = sphi 0, %s24
      %s28 = sphi 0, %s25
      %s29 = sphi 0, %s26
      %s30 = sphi 0, %s27
      %s31 = sphi 0, %s28
      %s47 = sphi 0, %s49
      %s50 = sphi 0, %s47
      %s51 = sphi 0, %s50
      %s67 = sphi 0, %s51
      %s75 = sphi 0, %s77
      %s78 = sphi 0, %s75
      %s79 = sphi 0, %s78
      %s95 = sphi 0, %s79
      %s101 = sphi 0, %s103
      %s104 = sphi 0, %s101
      %s105 = sphi 0, %s104
      %s121 = sphi 0, %s105
      %s129 = sphi 0, %s131
      %s132 = sphi 0, %s129
      %s133 = sphi 0, %s132
      %s149 = sphi 0, %s133
    $region4: #{fwd.1} parent=1 // loop_header_branch
      %19 = sbr.rel (%p17) target = $region8
    $region5: #{fwd.1} parent=1 // loop_body
      %s21 = ssub.s32 %s16, 1
      %s22 = ssub.s32 %s16, 2
      %s32 = sadd.s32 1, %s25
      %p33 = scmp.ge.s32.totalorder %s32, 1
      %s34 = scalar_select %p33, 0, %s32
      %s35 = sadd.s32 1, %s24
      %s36 = scalar_select %p33, %s35, %s24
      %p37 = scmp.ge.s32.totalorder %s36, 3
      %s38 = scalar_select %p37, 0, %s36
      %s39 = sadd.s32 1, %s23
      %s40 = scalar_select %p37, %s39, %s23
      %p41 = scmp.ge.s32.totalorder %s40, 1
      %s42 = scalar_select %p41, 0, %s40
      %s43 = ssub.s32 %s23, %s42
      %s44 = ssub.s32 %s25, %s34
      %s45 = sor.u32 %s43, %s44
      %p46 = scmp.eq.s32.totalorder %s45, 0
      %s48 = sadd.s32 %s47, 1
      %s49 = scalar_select %p46, %s47, %s48
      %p52 = pneg %p46
      %p53 = scmp.eq.s32.totalorder %s16, 2
      %p54 = por %p52, %p53
      %p55 = scmp.ne.s32.totalorder %s47, %s50
      %p56 = scmp.eq.s32.totalorder %s16, 0
      %p57 = por %p55, %p56
      %p58 = scmp.ne.s32.totalorder %s47, %s50
      %p59 = scmp.eq.s32.totalorder %s21, 2
      %p60 = por %p58, %p59
      %p61 = scmp.ne.s32.totalorder %s50, %s51
      %p62 = scmp.eq.s32.totalorder %s21, 0
      %p63 = por %p61, %p62
      %p64 = scmp.ne.s32.totalorder %s50, %s51
      %p65 = scmp.eq.s32.totalorder %s22, 2
      %p66 = por %p64, %p65
      %p68 = scmp.ne.s32.totalorder %s51, %s67
      %p69 = scmp.eq.s32.totalorder %s22, 0
      %p70 = por %p68, %p69
      %s71 = ssub.s32 %s25, %s34
      %s72 = ssub.s32 %s24, %s38
      %s73 = sor.u32 %s71, %s72
      %p74 = scmp.eq.s32.totalorder %s73, 0
      %s76 = sadd.s32 %s75, 1
      %s77 = scalar_select %p74, %s75, %s76
      %p80 = pneg %p74
      %p81 = scmp.eq.s32.totalorder %s16, 2
      %p82 = por %p80, %p81
      %p83 = scmp.ne.s32.totalorder %s75, %s78
      %p84 = scmp.eq.s32.totalorder %s16, 0
      %p85 = por %p83, %p84
      %p86 = scmp.ne.s32.totalorder %s75, %s78
      %p87 = scmp.eq.s32.totalorder %s21, 2
      %p88 = por %p86, %p87
      %p89 = scmp.ne.s32.totalorder %s78, %s79
      %p90 = scmp.eq.s32.totalorder %s21, 0
      %p91 = por %p89, %p90
      %p92 = scmp.ne.s32.totalorder %s78, %s79
      %p93 = scmp.eq.s32.totalorder %s22, 2
      %p94 = por %p92, %p93
      %p96 = scmp.ne.s32.totalorder %s79, %s95
      %p97 = scmp.eq.s32.totalorder %s22, 0
      %p98 = por %p96, %p97
      %s99 = ssub.s32 %s24, %s38
      %p100 = scmp.eq.s32.totalorder %s99, 0
      %s102 = sadd.s32 %s101, 1
      %s103 = scalar_select %p100, %s101, %s102
      %p106 = pneg %p100
      %p107 = scmp.eq.s32.totalorder %s16, 2
      %p108 = por %p106, %p107
      %p109 = scmp.ne.s32.totalorder %s101, %s104
      %p110 = scmp.eq.s32.totalorder %s16, 0
      %p111 = por %p109, %p110
      %p112 = scmp.ne.s32.totalorder %s101, %s104
      %p113 = scmp.eq.s32.totalorder %s21, 2
      %p114 = por %p112, %p113
      %p115 = scmp.ne.s32.totalorder %s104, %s105
      %p116 = scmp.eq.s32.totalorder %s21, 0
      %p117 = por %p115, %p116
      %p118 = scmp.ne.s32.totalorder %s104, %s105
      %p119 = scmp.eq.s32.totalorder %s22, 2
      %p120 = por %p118, %p119
      %p122 = scmp.ne.s32.totalorder %s105, %s121
      %p123 = scmp.eq.s32.totalorder %s22, 0
      %p124 = por %p122, %p123
      %s125 = ssub.s32 %s23, %s42
      %s126 = ssub.s32 %s24, %s38
      %s127 = sor.u32 %s125, %s126
      %p128 = scmp.eq.s32.totalorder %s127, 0
      %s130 = sadd.s32 %s129, 1
      %s131 = scalar_select %p128, %s129, %s130
      %p134 = pneg %p128
      %p135 = scmp.eq.s32.totalorder %s16, 2
      %p136 = por %p134, %p135
      %p137 = scmp.ne.s32.totalorder %s129, %s132
      %p138 = scmp.eq.s32.totalorder %s16, 0
      %p139 = por %p137, %p138
      %p140 = scmp.ne.s32.totalorder %s129, %s132
      %p141 = scmp.eq.s32.totalorder %s21, 2
      %p142 = por %p140, %p141
      %p143 = scmp.ne.s32.totalorder %s132, %s133
      %p144 = scmp.eq.s32.totalorder %s21, 0
      %p145 = por %p143, %p144
      %p146 = scmp.ne.s32.totalorder %s132, %s133
      %p147 = scmp.eq.s32.totalorder %s22, 2
      %p148 = por %p146, %p147
      %p150 = scmp.ne.s32.totalorder %s133, %s149
      %p151 = scmp.eq.s32.totalorder %s22, 0
      %p152 = por %p150, %p151
      %p153 = scmp.le.s32.totalorder 1, %s16
      %p154 = scmp.lt.s32.totalorder %s16, 4
      %p155 = pnand %p153, %p154
      %p156 = pneg %p155
      // Predicated region
      $region9: #{fwd.1} parent=5 // pred_check
        _
      $region10: #{fwd.1} parent=5 // pred_check_branch
        %158 = sbr.rel (%p155) target = $region12
      $region11: #{fwd.1} parent=5 // pred_region
        %s159 = ssub.s32 %s16, 1
        // Predicated region
        $region13: #{fwd.1} parent=11 // pred_check
          %p160 = pneg %p63
        $region14: #{fwd.1} parent=11 // pred_check_branch
          %162 = sbr.rel (%p160) target = $region16
        $region15: #{fwd.1} parent=11 // pred_region
          %s163 = smul.u32 2, %s26
          %s164 = smul.u32 4, %s28
          %166 = vsyncadd [#allocation4], 0
          %s167 = smul.addr %s163, 4
          %s168 = sadd.s32 %s164, %s167
          %s169 = smul.addr %s168, 8
          %s170 = scalar_lea.hbm %s0, %s169
          %s171 = sshll.u32 %s170, 4
          %s172 = int_to_ptr.hbm [resolvable:$true] %s171
          %s173 = sshll.u32 [#allocation3], 4
          %s174 = int_to_ptr.vmem [resolvable:$true] %s173
          %179 = dma.hbm_to_vmem [thread:$0]  %s172, 1024, %s174, [#allocation4], 512, 512, 32
        $region16: #{fwd.1} parent=11 // pred_fallthru
          _
      $region12: #{fwd.1} parent=5 // pred_fallthru
        _
      %p180 = scmp.lt.s32.totalorder %s16, 3
      // Predicated region
      $region17: #{fwd.1} parent=5 // pred_check
        %p181 = pneg %p180
      $region18: #{fwd.1} parent=5 // pred_check_branch
        %183 = sbr.rel (%p181) target = $region20
      $region19: #{fwd.1} parent=5 // pred_region
        // Predicated region
        $region21: #{fwd.1} parent=19 // pred_check
          %p184 = pneg %p85
        $region22: #{fwd.1} parent=19 // pred_check_branch
          %186 = sbr.rel (%p184) target = $region24
        $region23: #{fwd.1} parent=19 // pred_region
          %s187 = sand.u32 %s16, 1
          %s188 = scalar_lea.sflag [#allocation7], %s187
          %s189 = sand.u32 %s75, 1
          %s190 = smul.addr %s189, 256
          %s191 = scalar_lea.vmem [#allocation6], %s190
          %s192 = smul.u32 64, %s25
          %194 = vsyncadd %s188, 0
          %s195 = smul.addr %s192, 3
          %s196 = sadd.s32 %s24, %s195
          %s197 = smul.addr %s196, 4
          %s198 = scalar_lea.hbm %s1, %s197
          %s199 = sshll.u32 %s198, 4
          %s200 = int_to_ptr.hbm [resolvable:$true] %s199
          %s201 = sshll.u32 %s191, 4
          %s202 = int_to_ptr.vmem [resolvable:$true] %s201
          %207 = dma.hbm_to_vmem [thread:$0]  %s200, 4096, %s202, %s188, 192, 64, 4
        $region24: #{fwd.1} parent=19 // pred_fallthru
          _
        // Predicated region
        $region25: #{fwd.1} parent=19 // pred_check
          %p208 = pneg %p111
        $region26: #{fwd.1} parent=19 // pred_check_branch
          %210 = sbr.rel (%p208) target = $region28
        $region27: #{fwd.1} parent=19 // pred_region
          %s211 = sand.u32 %s16, 1
          %s212 = scalar_lea.sflag [#allocation7], %s211
          %s213 = sand.u32 %s101, 1
          %s214 = scalar_lea.vmem [#allocation8], %s213
          %216 = vsyncadd %s212, 0
          %s217 = scalar_lea.hbm %s2, %s24
          %s219 = sshll.u32 %s217, 4
          %s220 = int_to_ptr.hbm [resolvable:$true] %s219
          %s221 = sshll.u32 %s214, 4
          %s222 = int_to_ptr.vmem [resolvable:$true] %s221
          %224 = dma.hbm_to_vmem [thread:$0]  %s220, 16, %s222, %s212
        $region28: #{fwd.1} parent=19 // pred_fallthru
          _
      $region20: #{fwd.1} parent=5 // pred_fallthru
        _
      %p225 = scmp.le.s32.totalorder 1, %s16
      %p226 = scmp.lt.s32.totalorder %s16, 4
      %p227 = pnand %p225, %p226
      %p228 = pneg %p227
      // Predicated region
      $region29: #{fwd.1} parent=5 // pred_check
        _
      $region30: #{fwd.1} parent=5 // pred_check_branch
        %230 = sbr.rel (%p227) target = $region32
      $region31: #{fwd.1} parent=5 // pred_region
        %s231 = ssub.s32 %s16, 1
        // Predicated region
        $region33: #{fwd.1} parent=31 // pred_check
          %p232 = pneg %p63
        $region34: #{fwd.1} parent=31 // pred_check_branch
          %234 = sbr.rel (%p232) target = $region36
        $region35: #{fwd.1} parent=31 // pred_region
          %236 = dma.done [#allocation4], 1024
        $region36: #{fwd.1} parent=31 // pred_fallthru
          _
        %s237 = sand.u32 %s21, 1
        %s238 = scalar_lea.sflag [#allocation7], %s237
        %s239 = sand.u32 %s78, 1
        %s240 = smul.addr %s239, 256
        %s241 = scalar_lea.vmem [#allocation6], %s240
        // Predicated region
        $region37: #{fwd.1} parent=31 // pred_check
          %p242 = pneg %p91
        $region38: #{fwd.1} parent=31 // pred_check_branch
          %244 = sbr.rel (%p242) target = $region40
        $region39: #{fwd.1} parent=31 // pred_region
          %246 = dma.done %s238, 4096
        $region40: #{fwd.1} parent=31 // pred_fallthru
          _
        %s247 = sand.u32 %s21, 1
        %s248 = scalar_lea.sflag [#allocation7], %s247
        %s249 = sand.u32 %s104, 1
        %s250 = scalar_lea.vmem [#allocation8], %s249
        // Predicated region
        $region41: #{fwd.1} parent=31 // pred_check
          %p251 = pneg %p117
        $region42: #{fwd.1} parent=31 // pred_check_branch
          %253 = sbr.rel (%p251) target = $region44
        $region43: #{fwd.1} parent=31 // pred_region
          %255 = dma.done %s248, 16
        $region44: #{fwd.1} parent=31 // pred_fallthru
          _
        %p256 = pneg %p63
        %p257 = pneg %p60
        %s258 = sand.u32 %s21, 1
        %s259 = scalar_lea.sflag [#allocation7], %s258
        %s260 = sand.u32 %s78, 1
        %s261 = smul.addr %s260, 256
        %s262 = scalar_lea.vmem [#allocation6], %s261
        %p263 = pneg %p91
        %p264 = pneg %p88
        %s265 = sand.u32 %s21, 1
        %s266 = scalar_lea.sflag [#allocation7], %s265
        %s267 = sand.u32 %s104, 1
        %s268 = scalar_lea.vmem [#allocation8], %s267
        %p269 = pneg %p117
        %p270 = pneg %p114
        %p271 = pneg %p145
        %p272 = pneg %p142
        %s273 = sand.u32 %s132, 1
        %s274 = scalar_lea.sflag [#allocation5], %s273
        %s275 = sand.u32 %s132, 1
        %s276 = smul.addr %s275, 16
        %s277 = scalar_lea.vmem [#allocation9], %s276
        %s278 = smul.u32 2, %s26
        %s279 = smul.u32 4, %s28
        %s280 = smul.u32 64, %s28
        %s281 = smul.u32 2, %s26
        %p282 = scmp.eq.s32.totalorder %s28, 0
        // Predicated region
        $region45: #{fwd.1} parent=31 // pred_check
          %p283 = pneg %p282
        $region46: #{fwd.1} parent=31 // pred_check_branch
          %285 = sbr.rel (%p283) target = $region48
        $region47: #{fwd.1} parent=31 // pred_region
          %286 = vst [vmem:[#allocation2] sm:$0xff] 0.0
          %287 = vst [vmem:[#allocation2 + $0x8] sm:$0xff] 0.0
        $region48: #{fwd.1} parent=31 // pred_fallthru
          _
        %v288 = vld [vmem:[#allocation2] sm:$0xff]
        %v289 = vld [vmem:[#allocation2 + $0x8] sm:$0xff]
        %v290 = vld [vmem:[#allocation3] sm:$0xff]
        %v291 = vld [vmem:[#allocation3 + $0x8] sm:$0xff]
        %v292 = vld [vmem:[#allocation3 + $0x10] sm:$0xff]
        %v293 = vld [vmem:[#allocation3 + $0x18] sm:$0xff]
        %v294 = vld [vmem:[#allocation3 + $0x20] sm:$0xff]
        %v295 = vld [vmem:[#allocation3 + $0x28] sm:$0xff]
        %v296 = vld [vmem:[#allocation3 + $0x30] sm:$0xff]
        %v297 = vld [vmem:[#allocation3 + $0x38] sm:$0xff]
        %v298 = vpack.c.bf16 %v294, %v290
        %v299 = vpack.c.bf16 %v295, %v291
        %v300 = vpack.c.bf16 %v296, %v292
        %v301 = vpack.c.bf16 %v297, %v293
        %v302 = vld [vmem:[%s241] sm:$0xf]
        %v303 = vld [vmem:[%s241 + $0x4] sm:$0xf]
        %v304 = vld [vmem:[%s241 + $0x8] sm:$0xf]
        %v305 = vld [vmem:[%s241 + $0xc] sm:$0xf]
        %v306 = vld [vmem:[%s241 + $0x10] sm:$0xf]
        %v307 = vld [vmem:[%s241 + $0x14] sm:$0xf]
        %v308 = vld [vmem:[%s241 + $0x18] sm:$0xf]
        %v309 = vld [vmem:[%s241 + $0x1c] sm:$0xf]
        %v310 = vld [vmem:[%s241 + $0x20] sm:$0xf]
        %v311 = vld [vmem:[%s241 + $0x24] sm:$0xf]
        %v312 = vld [vmem:[%s241 + $0x28] sm:$0xf]
        %v313 = vld [vmem:[%s241 + $0x2c] sm:$0xf]
        %v314 = vld [vmem:[%s241 + $0x30] sm:$0xf]
        %v315 = vld [vmem:[%s241 + $0x34] sm:$0xf]
        %v316 = vld [vmem:[%s241 + $0x38] sm:$0xf]
        %v317 = vld [vmem:[%s241 + $0x3c] sm:$0xf]
        %v318 = vld [vmem:[%s241 + $0x40] sm:$0xf]
        %v319 = vld [vmem:[%s241 + $0x44] sm:$0xf]
        %v320 = vld [vmem:[%s241 + $0x48] sm:$0xf]
        %v321 = vld [vmem:[%s241 + $0x4c] sm:$0xf]
        %v322 = vld [vmem:[%s241 + $0x50] sm:$0xf]
        %v323 = vld [vmem:[%s241 + $0x54] sm:$0xf]
        %v324 = vld [vmem:[%s241 + $0x58] sm:$0xf]
        %v325 = vld [vmem:[%s241 + $0x5c] sm:$0xf]
        %v326 = vld [vmem:[%s241 + $0x60] sm:$0xf]
        %v327 = vld [vmem:[%s241 + $0x64] sm:$0xf]
        %v328 = vld [vmem:[%s241 + $0x68] sm:$0xf]
        %v329 = vld [vmem:[%s241 + $0x6c] sm:$0xf]
        %v330 = vld [vmem:[%s241 + $0x70] sm:$0xf]
        %v331 = vld [vmem:[%s241 + $0x74] sm:$0xf]
        %v332 = vld [vmem:[%s241 + $0x78] sm:$0xf]
        %v333 = vld [vmem:[%s241 + $0x7c] sm:$0xf]
        %v334 = vld [vmem:[%s241 + $0x80] sm:$0xf]
        %v335 = vld [vmem:[%s241 + $0x84] sm:$0xf]
        %v336 = vld [vmem:[%s241 + $0x88] sm:$0xf]
        %v337 = vld [vmem:[%s241 + $0x8c] sm:$0xf]
        %v338 = vld [vmem:[%s241 + $0x90] sm:$0xf]
        %v339 = vld [vmem:[%s241 + $0x94] sm:$0xf]
        %v340 = vld [vmem:[%s241 + $0x98] sm:$0xf]
        %v341 = vld [vmem:[%s241 + $0x9c] sm:$0xf]
        %v342 = vld [vmem:[%s241 + $0xa0] sm:$0xf]
        %v343 = vld [vmem:[%s241 + $0xa4] sm:$0xf]
        %v344 = vld [vmem:[%s241 + $0xa8] sm:$0xf]
        %v345 = vld [vmem:[%s241 + $0xac] sm:$0xf]
        %v346 = vld [vmem:[%s241 + $0xb0] sm:$0xf]
        %v347 = vld [vmem:[%s241 + $0xb4] sm:$0xf]
        %v348 = vld [vmem:[%s241 + $0xb8] sm:$0xf]
        %v349 = vld [vmem:[%s241 + $0xbc] sm:$0xf]
        %v350 = vld [vmem:[%s241 + $0xc0] sm:$0xf]
        %v351 = vld [vmem:[%s241 + $0xc4] sm:$0xf]
        %v352 = vld [vmem:[%s241 + $0xc8] sm:$0xf]
        %v353 = vld [vmem:[%s241 + $0xcc] sm:$0xf]
        %v354 = vld [vmem:[%s241 + $0xd0] sm:$0xf]
        %v355 = vld [vmem:[%s241 + $0xd4] sm:$0xf]
        %v356 = vld [vmem:[%s241 + $0xd8] sm:$0xf]
        %v357 = vld [vmem:[%s241 + $0xdc] sm:$0xf]
        %v358 = vld [vmem:[%s241 + $0xe0] sm:$0xf]
        %v359 = vld [vmem:[%s241 + $0xe4] sm:$0xf]
        %v360 = vld [vmem:[%s241 + $0xe8] sm:$0xf]
        %v361 = vld [vmem:[%s241 + $0xec] sm:$0xf]
        %v362 = vld [vmem:[%s241 + $0xf0] sm:$0xf]
        %v363 = vld [vmem:[%s241 + $0xf4] sm:$0xf]
        %v364 = vld [vmem:[%s241 + $0xf8] sm:$0xf]
        %v365 = vld [vmem:[%s241 + $0xfc] sm:$0xf]
        %v430 = vunpack.c.l.b16 %v302
        %v431 = vunpack.c.l.b16 %v303
        %v432 = vunpack.c.l.b16 %v304
        %v433 = vunpack.c.l.b16 %v305
        %v434 = vunpack.c.l.b16 %v306
        %v435 = vunpack.c.l.b16 %v307
        %v436 = vunpack.c.l.b16 %v308
        %v437 = vunpack.c.l.b16 %v309
        %v438 = vunpack.c.l.b16 %v310
        %v439 = vunpack.c.l.b16 %v311
        %v440 = vunpack.c.l.b16 %v312
        %v441 = vunpack.c.l.b16 %v313
        %v442 = vunpack.c.l.b16 %v314
        %v443 = vunpack.c.l.b16 %v315
        %v444 = vunpack.c.l.b16 %v316
        %v445 = vunpack.c.l.b16 %v317
        %v446 = vunpack.c.l.b16 %v318
        %v447 = vunpack.c.l.b16 %v319
        %v448 = vunpack.c.l.b16 %v320
        %v449 = vunpack.c.l.b16 %v321
        %v450 = vunpack.c.l.b16 %v322
        %v451 = vunpack.c.l.b16 %v323
        %v452 = vunpack.c.l.b16 %v324
        %v453 = vunpack.c.l.b16 %v325
        %v454 = vunpack.c.l.b16 %v326
        %v455 = vunpack.c.l.b16 %v327
        %v456 = vunpack.c.l.b16 %v328
        %v457 = vunpack.c.l.b16 %v329
        %v458 = vunpack.c.l.b16 %v330
        %v459 = vunpack.c.l.b16 %v331
        %v460 = vunpack.c.l.b16 %v332
        %v461 = vunpack.c.l.b16 %v333
        %v462 = vunpack.c.l.b16 %v334
        %v463 = vunpack.c.l.b16 %v335
        %v464 = vunpack.c.l.b16 %v336
        %v465 = vunpack.c.l.b16 %v337
        %v466 = vunpack.c.l.b16 %v338
        %v467 = vunpack.c.l.b16 %v339
        %v468 = vunpack.c.l.b16 %v340
        %v469 = vunpack.c.l.b16 %v341
        %v470 = vunpack.c.l.b16 %v342
        %v471 = vunpack.c.l.b16 %v343
        %v472 = vunpack.c.l.b16 %v344
        %v473 = vunpack.c.l.b16 %v345
        %v474 = vunpack.c.l.b16 %v346
        %v475 = vunpack.c.l.b16 %v347
        %v476 = vunpack.c.l.b16 %v348
        %v477 = vunpack.c.l.b16 %v349
        %v478 = vunpack.c.l.b16 %v350
        %v479 = vunpack.c.l.b16 %v351
        %v480 = vunpack.c.l.b16 %v352
        %v481 = vunpack.c.l.b16 %v353
        %v482 = vunpack.c.l.b16 %v354
        %v483 = vunpack.c.l.b16 %v355
        %v484 = vunpack.c.l.b16 %v356
        %v485 = vunpack.c.l.b16 %v357
        %v486 = vunpack.c.l.b16 %v358
        %v487 = vunpack.c.l.b16 %v359
        %v488 = vunpack.c.l.b16 %v360
        %v489 = vunpack.c.l.b16 %v361
        %v490 = vunpack.c.l.b16 %v362
        %v491 = vunpack.c.l.b16 %v363
        %v492 = vunpack.c.l.b16 %v364
        %v493 = vunpack.c.l.b16 %v365
        %v494 = vpack.c.b16 %v431, %v430
        %v495 = vpack.c.b16 %v433, %v432
        %v496 = vpack.c.b16 %v435, %v434
        %v497 = vpack.c.b16 %v437, %v436
        %v498 = vpack.c.b16 %v439, %v438
        %v499 = vpack.c.b16 %v441, %v440
        %v500 = vpack.c.b16 %v443, %v442
        %v501 = vpack.c.b16 %v445, %v444
        %v502 = vpack.c.b16 %v447, %v446
        %v503 = vpack.c.b16 %v449, %v448
        %v504 = vpack.c.b16 %v451, %v450
        %v505 = vpack.c.b16 %v453, %v452
        %v506 = vpack.c.b16 %v455, %v454
        %v507 = vpack.c.b16 %v457, %v456
        %v508 = vpack.c.b16 %v459, %v458
        %v509 = vpack.c.b16 %v461, %v460
        %v510 = vpack.c.b16 %v463, %v462
        %v511 = vpack.c.b16 %v465, %v464
        %v512 = vpack.c.b16 %v467, %v466
        %v513 = vpack.c.b16 %v469, %v468
        %v514 = vpack.c.b16 %v471, %v470
        %v515 = vpack.c.b16 %v473, %v472
        %v516 = vpack.c.b16 %v475, %v474
        %v517 = vpack.c.b16 %v477, %v476
        %v518 = vpack.c.b16 %v479, %v478
        %v519 = vpack.c.b16 %v481, %v480
        %v520 = vpack.c.b16 %v483, %v482
        %v521 = vpack.c.b16 %v485, %v484
        %v522 = vpack.c.b16 %v487, %v486
        %v523 = vpack.c.b16 %v489, %v488
        %v524 = vpack.c.b16 %v491, %v490
        %v525 = vpack.c.b16 %v493, %v492
        %558 = vmatpush.bf16.msra.mxu0 %v501
        %559 = vmatpush.bf16.msra.mxu0 %v500
        %560 = vmatpush.bf16.msra.mxu0 %v499
        %561 = vmatpush.bf16.msra.mxu0 %v498
        %562 = vmatpush.bf16.msra.mxu0 %v497
        %563 = vmatpush.bf16.msra.mxu0 %v496
        %564 = vmatpush.bf16.msra.mxu0 %v495
        %565 = vmatpush.bf16.msra.mxu0 %v494
        %566 = vmatmul.bf16.gmra.mxu0 %v298
        %v567 = vpop.f32.mrf.mxu0
        %v568 = vadd.f32 0.0, %v567
        %v569 = vpop.f32.mrf.mxu0
        %v570 = vadd.f32 0.0, %v569
        %571 = vdwg.mxu0
        %572 = vmatpush.bf16.msra.mxu0 %v509
        %573 = vmatpush.bf16.msra.mxu0 %v508
        %574 = vmatpush.bf16.msra.mxu0 %v507
        %575 = vmatpush.bf16.msra.mxu0 %v506
        %576 = vmatpush.bf16.msra.mxu0 %v505
        %577 = vmatpush.bf16.msra.mxu0 %v504
        %578 = vmatpush.bf16.msra.mxu0 %v503
        %579 = vmatpush.bf16.msra.mxu0 %v502
        %580 = vmatmul.bf16.gmra.mxu0 %v299
        %v581 = vpop.f32.mrf.mxu0
        %v582 = vadd.f32 %v568, %v581
        %v583 = vpop.f32.mrf.mxu0
        %v584 = vadd.f32 %v570, %v583
        %585 = vdwg.mxu0
        %586 = vmatpush.bf16.msra.mxu0 %v517
        %587 = vmatpush.bf16.msra.mxu0 %v516
        %588 = vmatpush.bf16.msra.mxu0 %v515
        %589 = vmatpush.bf16.msra.mxu0 %v514
        %590 = vmatpush.bf16.msra.mxu0 %v513
        %591 = vmatpush.bf16.msra.mxu0 %v512
        %592 = vmatpush.bf16.msra.mxu0 %v511
        %593 = vmatpush.bf16.msra.mxu0 %v510
        %594 = vmatmul.bf16.gmra.mxu0 %v300
        %v595 = vpop.f32.mrf.mxu0
        %v596 = vadd.f32 %v582, %v595
        %v597 = vpop.f32.mrf.mxu0
        %v598 = vadd.f32 %v584, %v597
        %599 = vdwg.mxu0
        %600 = vmatpush.bf16.msra.mxu0 %v525
        %601 = vmatpush.bf16.msra.mxu0 %v524
        %602 = vmatpush.bf16.msra.mxu0 %v523
        %603 = vmatpush.bf16.msra.mxu0 %v522
        %604 = vmatpush.bf16.msra.mxu0 %v521
        %605 = vmatpush.bf16.msra.mxu0 %v520
        %606 = vmatpush.bf16.msra.mxu0 %v519
        %607 = vmatpush.bf16.msra.mxu0 %v518
        %608 = vmatmul.bf16.gmra.mxu0 %v301
        %v609 = vpop.f32.mrf.mxu0
        %v610 = vadd.f32 %v596, %v609
        %v611 = vpop.f32.mrf.mxu0
        %v612 = vadd.f32 %v598, %v611
        %613 = vdwg.mxu0
        %v614 = vadd.f32 %v288, %v610
        %v615 = vadd.f32 %v289, %v612
        %616 = vst [vmem:[#allocation2] sm:$0xff] %v614
        %617 = vst [vmem:[#allocation2 + $0x8] sm:$0xff] %v615
        // Predicated region
        $region49: #{fwd.1} parent=31 // pred_check
          %p618 = pneg %p282
        $region50: #{fwd.1} parent=31 // pred_check_branch
          %620 = sbr.rel (%p618) target = $region52
        $region51: #{fwd.1} parent=31 // pred_region
          %v621 = vld [vmem:[#allocation2] sm:$0xff]
          %v622 = vld [vmem:[#allocation2 + $0x8] sm:$0xff]
          %v623 = vld [vmem:[%s250] sm:$0x1]
          %v625 = vperm.slane %v623, 0
          %v627 = vadd.f32 %v621, %v625
          %v628 = vadd.f32 %v622, %v625
          %629 = vst [vmem:[%s277] sm:$0xff] %v627
          %630 = vst [vmem:[%s277 + $0x8] sm:$0xff] %v628
        $region52: #{fwd.1} parent=31 // pred_fallthru
          _
        %s631 = sand.u32 %s132, 1
        %s632 = scalar_lea.sflag [#allocation5], %s631
        %s633 = sand.u32 %s132, 1
        %s634 = smul.addr %s633, 16
        %s635 = scalar_lea.vmem [#allocation9], %s634
        // Predicated region
        $region53: #{fwd.1} parent=31 // pred_check
          %p636 = pneg %p142
        $region54: #{fwd.1} parent=31 // pred_check_branch
          %638 = sbr.rel (%p636) target = $region56
        $region55: #{fwd.1} parent=31 // pred_region
          %s639 = smul.u32 2, %s26
          %641 = vsyncadd %s632, 0
          %s642 = smul.addr %s639, 3
          %s643 = sadd.s32 %s27, %s642
          %s644 = smul.addr %s643, 8
          %s645 = scalar_lea.hbm %s3, %s644
          %s646 = sshll.u32 %s635, 4
          %s647 = int_to_ptr.vmem [resolvable:$true] %s646
          %s648 = sshll.u32 %s645, 4
          %s649 = int_to_ptr.hbm [resolvable:$true] %s648
          %654 = dma.vmem_to_hbm [thread:$0]  %s647, 256, %s649, %s632, 128, 384, 8
        $region56: #{fwd.1} parent=31 // pred_fallthru
          _
      $region32: #{fwd.1} parent=5 // pred_fallthru
        _
      %p655 = scmp.le.s32.totalorder 2, %s16
      // Predicated region
      $region57: #{fwd.1} parent=5 // pred_check
        %p656 = pneg %p655
      $region58: #{fwd.1} parent=5 // pred_check_branch
        %658 = sbr.rel (%p656) target = $region60
      $region59: #{fwd.1} parent=5 // pred_region
        %s659 = ssub.s32 %s16, 2
        // Predicated region
        $region61: #{fwd.1} parent=59 // pred_check
          %p660 = pneg %p148
        $region62: #{fwd.1} parent=59 // pred_check_branch
          %662 = sbr.rel (%p660) target = $region64
        $region63: #{fwd.1} parent=59 // pred_region
          %s663 = sand.u32 %s133, 1
          %s664 = scalar_lea.sflag [#allocation5], %s663
          %s665 = sand.u32 %s133, 1
          %s666 = smul.addr %s665, 16
          %s667 = scalar_lea.vmem [#allocation9], %s666
          %669 = dma.done %s664, 256
        $region64: #{fwd.1} parent=59 // pred_fallthru
          _
      $region60: #{fwd.1} parent=5 // pred_fallthru
        _
    $region6: #{fwd.1} parent=1 // loop_footer
      %s20 = sadd.s32 1, %s16
    $region7: #{fwd.1} parent=1 // loop_footer_branch
      %15 = sbr.rel target = $region3
    $region8: #{fwd.1} parent=1 // loop_exit
      _
    %670 = vsyncpa [#allocation4], 1
    %s671 = scalar_lea.sflag [#allocation4], 1
    %672 = vsyncpa %s671, 1
    %673 = vsyncpa [#allocation7], 1
    %s674 = scalar_lea.sflag [#allocation7], 1
    %675 = vsyncpa %s674, 1
    %676 = vsyncpa [#allocation5], 1
    %s677 = scalar_lea.sflag [#allocation5], 1
    %678 = vsyncpa %s677, 1

</llo_original>
